<compile_context>
chip_gen: v5e
topology: v5e:2x2
jax: 0.10.0
libtpu: 0.0.40
codegen_flags: <defaults>
</compile_context>

<pallas_src>
import jax
import jax.numpy as jnp
from jax.experimental import pallas as pl
from jax.experimental.pallas import tpu as pltpu


def _make_value_kernel(tile_s: int, tiles_per_split: int, n_split: int):
    """Kernel factory closing over static shape info."""

    def kernel(h_ref, w_ref, o_ref, acc_ref):
        # Grid: (batch [parallel], seq-split [parallel], seq-tile [reduction]).
        sp = pl.program_id(1)
        si = pl.program_id(2)

        @pl.when(si == 0)
        def _init():
            acc_ref[...] = jnp.zeros_like(acc_ref)

        # Fused upcast: bf16 rows accumulate into f32 without materializing a
        # full f32 copy of the tile (keeps VALU/vreg traffic under the DMA).
        acc_ref[...] += jnp.sum(h_ref[...], axis=0, keepdims=True,
                                dtype=jnp.float32)                    # (1, H)

        @pl.when(si == tiles_per_split - 1)
        def _finalize():
            # values[:, :-1]: subtract the single last sequence row instead of
            # masking the whole tensor.  Only the split owning the final tile
            # subtracts; re-read the row from the ref (cheap static slice)
            # rather than keeping the converted tile live.
            last_row = h_ref[tile_s - 1:tile_s, :].astype(jnp.float32)  # (1, H)
            last_scale = (sp == n_split - 1).astype(jnp.float32)
            h_sum = acc_ref[...] - last_scale * last_row                # (1, H)
            # Tiny N=1 contraction: VPU multiply + lane reduce (skip the MXU).
            o_ref[...] = jnp.sum(h_sum * w_ref[...], axis=-1, keepdims=True)

    return kernel


def _row_align(dtype) -> int:
    itemsize = jnp.dtype(dtype).itemsize
    return max(8, 32 // max(itemsize, 1))          # 8 (f32), 16 (bf16), 32 (8-bit)


def _pick_tile_s(S: int, H: int, dtype) -> int:
    """Largest aligned divisor of S near the per-dtype target row count."""
    itemsize = jnp.dtype(dtype).itemsize
    align = _row_align(dtype)
    # Target rows per tile: amortize the ~0.35 us/step overhead while keeping
    # the double-buffered tile well inside v7x's 64 MiB physical VMEM.
    target_rows = 2048 if itemsize >= 4 else 4096
    bytes_cap = 12 * 1024 * 1024                   # per-buffer cap (~24 MiB x2)
    rows_cap = max(align, (bytes_cap // max(H * itemsize, 1)) // align * align)
    target = min(S, target_rows, rows_cap)
    if S % target == 0 and (target == S or target % align == 0):
        return target
    best = None
    for d in range(align, target + 1, align):      # target <= 4096: cheap scan
        if S % d == 0:
            best = d
    if best is not None:
        return best
    return S                                       # whole-sequence block (rare)


def _pick_n_split(B: int, n_seq_tiles: int) -> int:
    # v7x has 2 TensorCores; when the batch alone can't shard evenly (B == 1 or
    # odd), split the sequence reduction in two so both TCs stream HBM.
    # Harmless (size-1 axis) on v5e/v6e.
    if n_seq_tiles >= 2 and n_seq_tiles % 2 == 0 and B % 2 == 1:
        return 2
    return 1


def ledrm_value_head(last_hidden_states, w, b, *, tile_s=None):
    """Linear(H,1) -> drop last token -> mean over sequence, via Pallas.

    Args:
      last_hidden_states: (B, S, H) f32 or bf16.
      w: (1, H) value-head weight (PyTorch nn.Linear(H, 1).weight layout).
      b: (1, 1) value-head bias.
    Returns:
      (B,) f32 values.
    """
    B, S, H = last_hidden_states.shape
    assert S >= 2, "need at least 2 sequence positions (mean over S-1)"
    dtype = last_hidden_states.dtype
    itemsize = jnp.dtype(dtype).itemsize
    align = _row_align(dtype)

    if tile_s is None or S % tile_s != 0 or (tile_s != S and tile_s % align != 0):
        tile_s = _pick_tile_s(S, H, dtype)
    n_seq_tiles = S // tile_s
    n_split = _pick_n_split(B, n_seq_tiles)
    tiles_per_split = n_seq_tiles // n_split

    # Request only what the pipeline needs (2 buffers of the hidden tile plus a
    # few MiB of margin), capped well under v7x's 64 MiB physical VMEM.
    h_tile_bytes = tile_s * H * itemsize
    vmem_limit = int(min(48 * 1024 * 1024,
                         max(8 * 1024 * 1024, 2 * h_tile_bytes + (4 << 20))))

    kernel = _make_value_kernel(tile_s, tiles_per_split, n_split)

    partials = pl.pallas_call(
        kernel,
        out_shape=jax.ShapeDtypeStruct((B, n_split, 1, 1), jnp.float32),
        grid_spec=pltpu.PrefetchScalarGridSpec(
            num_scalar_prefetch=0,
            grid=(B, n_split, tiles_per_split),
            in_specs=[
                # Hidden states: streamed one (tile_s, H) block per grid step.
                pl.BlockSpec(
                    (None, tile_s, H),
                    lambda bi, sp, si: (bi, sp * tiles_per_split + si, 0)),
                # Weight: constant index_map -> fetched once, lane-dense (1, H).
                pl.BlockSpec((1, H), lambda bi, sp, si: (0, 0)),
            ],
            # Per-(batch, split) output block stays resident across the
            # sequence-reduction axis.
            out_specs=pl.BlockSpec((None, None, 1, 1),
                                   lambda bi, sp, si: (bi, sp, 0, 0)),
            scratch_shapes=[pltpu.VMEM((1, H), jnp.float32)],
        ),
        compiler_params=pltpu.CompilerParams(
            dimension_semantics=("parallel", "parallel", "arbitrary"),
            vmem_limit_bytes=vmem_limit,
        ),
    )(last_hidden_states, w.astype(jnp.float32))

    # Combine split partials, apply mean over the first S-1 positions and bias.
    inv_len = jnp.float32(1.0 / float(S - 1))
    value = partials.sum(axis=(1, 2, 3)) * inv_len + b.reshape(()).astype(jnp.float32)
    return value                                                   # (B,)


def stub_longformer_last_hidden(sequences, attention_mask, embed_table):
    # TODO(synk): the pretrained LongformerModel encoder has no clean Pallas
    # equivalent in-script; stand in for it with a deterministic embedding
    # lookup so the value-head + mean-reduction hot path is exercised exactly.
    h = embed_table[sequences]                                     # (B, S, H)
    if attention_mask is not None:
        h = h * attention_mask[..., None].astype(h.dtype)
    return h


def _reference(hidden, w, b):
    vals = jnp.einsum("bsh,oh->bso", hidden.astype(jnp.float32),
                      w.astype(jnp.float32)) + b.reshape(()).astype(jnp.float32)
    return vals[:, :-1].mean(axis=1)[:, 0]


if __name__ == "__main__":
    key = jax.random.PRNGKey(0)
    k_seq, k_emb, k_w, k_b, k_h2, k_h3 = jax.random.split(key, 6)

    # ---- Test 1: stubbed backbone path (B=2, S=16, H=32), f32, no split. ----
    B, S, H, V = 2, 16, 32, 64
    sequences = jax.random.randint(k_seq, (B, S), 0, V, dtype=jnp.int32)
    attention_mask = jnp.ones((B, S), dtype=jnp.int32)
    embed_table = jax.random.normal(k_emb, (V, H), dtype=jnp.float32)
    # Parameters as in the module's __init__ (nn.Linear(H, 1) layouts).
    w = jax.random.normal(k_w, (1, H), dtype=jnp.float32) * (1.0 / (H + 1))
    bound = 1.0 / (H ** 0.5)
    b = jax.random.uniform(k_b, (1, 1), dtype=jnp.float32,
                           minval=-bound, maxval=bound)

    hidden = stub_longformer_last_hidden(sequences, attention_mask, embed_table)
    value = jax.block_until_ready(ledrm_value_head(hidden, w, b, tile_s=8))
    ref = _reference(hidden, w, b)
    assert value.shape == (B,), value.shape
    assert jnp.allclose(value, ref, atol=1e-5, rtol=1e-5), (value, ref)

    # ---- Test 2: B=1 (odd) -> 2-way sequence split path, f32. ----
    B2, S2, H2 = 1, 32, 128
    hidden2 = jax.random.normal(k_h2, (B2, S2, H2), dtype=jnp.float32)
    w2 = jax.random.normal(k_w, (1, H2), dtype=jnp.float32) * (1.0 / (H2 + 1))
    value2 = jax.block_until_ready(ledrm_value_head(hidden2, w2, b, tile_s=8))
    ref2 = _reference(hidden2, w2, b)
    assert value2.shape == (B2,), value2.shape
    assert jnp.allclose(value2, ref2, atol=1e-5, rtol=1e-5), (value2, ref2)

    # ---- Test 3: bf16 hidden states (16-row sublane alignment) with split. ----
    hidden3 = jax.random.normal(k_h3, (B2, S2, H2), dtype=jnp.float32
                                ).astype(jnp.bfloat16)
    value3 = jax.block_until_ready(ledrm_value_head(hidden3, w2, b, tile_s=16))
    ref3 = _reference(hidden3, w2, b)
    assert value3.shape == (B2,), value3.shape
    assert jnp.allclose(value3, ref3, atol=1e-3, rtol=1e-3), (value3, ref3)

    print("KERNEL_OK")
</pallas_src>

<mosaic_0001>
module attributes {stable_mosaic.version = 11 : i64} {
  func.func @kernel(%arg0: i32, %arg1: i32, %arg2: i32, %arg3: memref<1x8x32xf32, #tpu.memory_space<vmem>>, %arg4: memref<1x32xf32, #tpu.memory_space<vmem>>, %arg5: memref<1x1x1x1xf32, #tpu.memory_space<vmem>>, %arg6: memref<1x32xf32, #tpu.memory_space<vmem>>) attributes {dimension_semantics = [#tpu.dimension_semantics<parallel>, #tpu.dimension_semantics<parallel>, #tpu.dimension_semantics<arbitrary>], iteration_bounds = array<i64: 2, 1, 2>, scalar_prefetch = 0 : i64, scratch_operands = 1 : i64, tpu.core_type = #tpu.core_type<tc>, window_params = [{transform_indices = @transform_0, window_bounds = array<i64: 1, 8, 32>}, {pipeline_mode = #tpu.pipeline_mode<synchronous>, transform_indices = @transform_1, window_bounds = array<i64: 1, 32>}, {transform_indices = @transform_2, window_bounds = array<i64: 1, 1, 1, 1>}]} {
    %c0_i32 = arith.constant 0 : i32
    %0 = arith.cmpi eq, %arg2, %c0_i32 : i32
    %1 = arith.extui %0 : i1 to i32
    %c0_i32_0 = arith.constant 0 : i32
    %2 = arith.cmpi ne, %1, %c0_i32_0 : i32
    scf.if %2 {
      %cst_8 = arith.constant 0.000000e+00 : f32
      %13 = vector.broadcast %cst_8 : f32 to vector<1x32xf32>
      %c0_9 = arith.constant 0 : index
      %c0_10 = arith.constant 0 : index
      %14 = vector.load %arg6[%c0_9, %c0_10] : memref<1x32xf32, #tpu.memory_space<vmem>>, vector<1x32xf32>
      tpu.vector_store %arg6[%c0_9, %c0_10], %13 {strides = array<i32>} : memref<1x32xf32, #tpu.memory_space<vmem>>, vector<1x32xf32>,
    } else {
    }
    %c0 = arith.constant 0 : index
    %c0_1 = arith.constant 0 : index
    %3 = vector.load %arg6[%c0, %c0_1] : memref<1x32xf32, #tpu.memory_space<vmem>>, vector<1x32xf32>
    %c0_2 = arith.constant 0 : index
    %c0_3 = arith.constant 0 : index
    %c0_4 = arith.constant 0 : index
    %4 = vector.load %arg3[%c0_2, %c0_3, %c0_4] : memref<1x8x32xf32, #tpu.memory_space<vmem>>, vector<1x8x32xf32>
    %5 = vector.shape_cast %4 : vector<1x8x32xf32> to vector<8x32xf32>
    %cst = arith.constant dense<0.000000e+00> : vector<32xf32>
    %6 = vector.multi_reduction <add>, %5, %cst [0] : vector<8x32xf32> to vector<32xf32>
    %7 = vector.shape_cast %6 : vector<32xf32> to vector<1x32xf32>
    %8 = arith.addf %3, %7 : vector<1x32xf32>
    %c0_5 = arith.constant 0 : index
    %c0_6 = arith.constant 0 : index
    %9 = vector.load %arg6[%c0_5, %c0_6] : memref<1x32xf32, #tpu.memory_space<vmem>>, vector<1x32xf32>
    tpu.vector_store %arg6[%c0_5, %c0_6], %8 {strides = array<i32>} : memref<1x32xf32, #tpu.memory_space<vmem>>, vector<1x32xf32>,
    %c1_i32 = arith.constant 1 : i32
    %10 = arith.cmpi eq, %arg2, %c1_i32 : i32
    %11 = arith.extui %10 : i1 to i32
    %c0_i32_7 = arith.constant 0 : i32
    %12 = arith.cmpi ne, %11, %c0_i32_7 : i32
    scf.if %12 {
      %c0_8 = arith.constant 0 : index
      %c7 = arith.constant 7 : index
      %c0_9 = arith.constant 0 : index
      %13 = vector.load %arg3[%c0_8, %c7, %c0_9] : memref<1x8x32xf32, #tpu.memory_space<vmem>>, vector<1x1x32xf32>
      %14 = vector.shape_cast %13 : vector<1x1x32xf32> to vector<1x32xf32>
      %c0_i32_10 = arith.constant 0 : i32
      %15 = arith.cmpi eq, %arg1, %c0_i32_10 : i32
      %16 = arith.extui %15 : i1 to i32
      %17 = arith.sitofp %16 : i32 to f32
      %c0_11 = arith.constant 0 : index
      %c0_12 = arith.constant 0 : index
      %18 = vector.load %arg6[%c0_11, %c0_12] : memref<1x32xf32, #tpu.memory_space<vmem>>, vector<1x32xf32>
      %19 = vector.broadcast %17 : f32 to vector<1x32xf32>
      %20 = arith.mulf %19, %14 : vector<1x32xf32>
      %21 = arith.subf %18, %20 : vector<1x32xf32>
      %c0_13 = arith.constant 0 : index
      %c0_14 = arith.constant 0 : index
      %22 = vector.load %arg4[%c0_13, %c0_14] : memref<1x32xf32, #tpu.memory_space<vmem>>, vector<1x32xf32>
      %23 = arith.mulf %21, %22 : vector<1x32xf32>
      %cst_15 = arith.constant dense<0.000000e+00> : vector<1xf32>
      %24 = vector.multi_reduction <add>, %23, %cst_15 [1] : vector<1x32xf32> to vector<1xf32>
      %25 = vector.shape_cast %24 : vector<1xf32> to vector<1x1xf32>
      %c0_16 = arith.constant 0 : index
      %c0_17 = arith.constant 0 : index
      %c0_18 = arith.constant 0 : index
      %c0_19 = arith.constant 0 : index
      %26 = vector.load %arg5[%c0_16, %c0_17, %c0_18, %c0_19] : memref<1x1x1x1xf32, #tpu.memory_space<vmem>>, vector<1x1x1x1xf32>
      %27 = vector.shape_cast %26 : vector<1x1x1x1xf32> to vector<1x1xf32>
      %28 = vector.shape_cast %25 : vector<1x1xf32> to vector<1x1x1x1xf32>
      tpu.vector_store %arg5[%c0_16, %c0_17, %c0_18, %c0_19], %28 {strides = array<i32>} : memref<1x1x1x1xf32, #tpu.memory_space<vmem>>, vector<1x1x1x1xf32>,
    } else {
    }
    return
  }
  func.func @transform_0(%arg0: i32, %arg1: i32, %arg2: i32) -> (i32, i32, i32) {
    %c2_i32 = arith.constant 2 : i32
    %0 = arith.muli %arg1, %c2_i32 : i32
    %1 = arith.addi %0, %arg2 : i32
    %c0_i32 = arith.constant 0 : i32
    %c0_i32_0 = arith.constant 0 : i32
    return %arg0, %1, %c0_i32 : i32, i32, i32
  }
  func.func @transform_1(%arg0: i32, %arg1: i32, %arg2: i32) -> (i32, i32) {
    %c0_i32 = arith.constant 0 : i32
    %c0_i32_0 = arith.constant 0 : i32
    %c0_i32_1 = arith.constant 0 : i32
    return %c0_i32, %c0_i32_0 : i32, i32
  }
  func.func @transform_2(%arg0: i32, %arg1: i32, %arg2: i32) -> (i32, i32, i32, i32) {
    %c0_i32 = arith.constant 0 : i32
    %c0_i32_0 = arith.constant 0 : i32
    %c0_i32_1 = arith.constant 0 : i32
    return %arg0, %arg1, %c0_i32, %c0_i32_0 : i32, i32, i32, i32
  }
}

</mosaic_0001>

<llo_original>
// kernel: tpu_custom_call.1
$region0: #{tpu_custom_call.1}
  #allocation0 [shape = 'u32[]', space=smem, size = 0x4, offset = 0x4, fixed_abs, tag = 'smem constant byte address 0x4 - core index']
  #allocation1 [shape = 'u32[72,128]{1,0:T(1,128)}', space=vmem, size = 0x9000, scoped, tag = 'internal scratch']
  #allocation2 [shape = 'f32[1,32]{1,0:T(1,128)}', space=vmem, size = 0x200, scoped, tag = 'scratch operand']
  %s0 = inlined_call_operand.hbm [shape: f32[2,16,32], index: 0, kind: input, shape index: {}]
  %s1 = inlined_call_operand.hbm [shape: f32[1,32], index: 1, kind: input, shape index: {}]
  %s2 = inlined_call_operand.vmem [shape: f32[2,1,1,1], index: 2, kind: output, shape index: {}]
  %s3 = sld [smem:[#allocation0]]
  $region57: #{tpu_custom_call.1} parent=0
    _
  %s5 = ssub.s32 1, %s3
  %s6 = scalar_select 0, %s5, %s3
  $region1: #{tpu_custom_call.1} parent=0
    #allocation3 [shape = 'u8[8192]{0}', space=vmem, size = 0x2000, scoped, tag = 'input window, operand 0']
    #allocation4 [shape = 's32[2]{0}', space=sflag, size = 0x8, scoped, tag = 'scoped memory for tpu_custom_call.1']
    #allocation5 [shape = 'u8[512]{0}', space=vmem, size = 0x400, scoped, tag = 'input window, operand 1, single buffered']
    #allocation6 [shape = 's32[1]{0}', space=sflag, size = 0x4, scoped, tag = 'scoped memory for tpu_custom_call.1']
    %7 = vsyncpa [#allocation4], 0
    %s8 = scalar_lea.sflag [#allocation4], 1
    %9 = vsyncpa %s8, 0
    %10 = vsyncpa [#allocation6], 0
    loop: start=0, step=1, limit=6
    $region2: #{tpu_custom_call.1} parent=1 // loop_pre_header
      _
    $region3: #{tpu_custom_call.1} parent=1 // loop_header
      %s12 = sphi 0, %s16
      %p13 = scmp.ge.s32.totalorder %s12, 6
      %s19 = sphi 0, %s38
      %s20 = sphi 0, %s34
      %s21 = sphi 0, %s30
      %s22 = sphi 0, %s19
      %s23 = sphi 0, %s20
      %s24 = sphi 0, %s21
      %s25 = sphi 0, %s22
      %s26 = sphi 0, %s23
      %s27 = sphi 0, %s24
      %s47 = sphi 0, %s49
      %s50 = sphi 0, %s47
      %s51 = sphi 0, %s50
      %s67 = sphi 0, %s51
      %s71 = sphi 0, %s71
      %s73 = sphi 0, %s71
      %s74 = sphi 0, %s73
      %s88 = sphi 0, %s74
      %s96 = sphi 0, %s98
      %s99 = sphi 0, %s96
      %s100 = sphi 0, %s99
      %s116 = sphi 0, %s100
    $region4: #{tpu_custom_call.1} parent=1 // loop_header_branch
      %15 = sbr.rel (%p13) target = $region8
    $region5: #{tpu_custom_call.1} parent=1 // loop_body
      %s17 = ssub.s32 %s12, 1
      %s18 = ssub.s32 %s12, 2
      %s28 = sadd.s32 1, %s21
      %p29 = scmp.ge.s32.totalorder %s28, 2
      %s30 = scalar_select %p29, 0, %s28
      %s31 = sadd.s32 1, %s20
      %s32 = scalar_select %p29, %s31, %s20
      %p33 = scmp.ge.s32.totalorder %s32, 1
      %s34 = scalar_select %p33, 0, %s32
      %s35 = sadd.s32 1, %s19
      %s36 = scalar_select %p33, %s35, %s19
      %p37 = scmp.ge.s32.totalorder %s36, 2
      %s38 = scalar_select %p37, 0, %s36
      %s39 = smul.u32 %s20, 2
      %s40 = sadd.s32 %s39, %s21
      %s41 = smul.u32 %s34, 2
      %s42 = sadd.s32 %s41, %s30
      %s43 = ssub.s32 %s19, %s38
      %s44 = ssub.s32 %s40, %s42
      %s45 = sor.u32 %s43, %s44
      %p46 = scmp.eq.s32.totalorder %s45, 0
      %s48 = sadd.s32 %s47, 1
      %s49 = scalar_select %p46, %s47, %s48
      %p52 = pneg %p46
      %p53 = scmp.eq.s32.totalorder %s12, 3
      %p54 = por %p52, %p53
      %p55 = scmp.ne.s32.totalorder %s47, %s50
      %p56 = scmp.eq.s32.totalorder %s12, 0
      %p57 = por %p55, %p56
      %p58 = scmp.ne.s32.totalorder %s47, %s50
      %p59 = scmp.eq.s32.totalorder %s17, 3
      %p60 = por %p58, %p59
      %p61 = scmp.ne.s32.totalorder %s50, %s51
      %p62 = scmp.eq.s32.totalorder %s17, 0
      %p63 = por %p61, %p62
      %p64 = scmp.ne.s32.totalorder %s50, %s51
      %p65 = scmp.eq.s32.totalorder %s18, 3
      %p66 = por %p64, %p65
      %p68 = scmp.ne.s32.totalorder %s51, %s67
      %p69 = scmp.eq.s32.totalorder %s18, 0
      %p70 = por %p68, %p69
      %s72 = sadd.s32 %s71, 1
      %p75 = scmp.eq.s32.totalorder %s12, 3
      %p76 = scmp.ne.s32.totalorder %s71, %s73
      %p77 = scmp.eq.s32.totalorder %s12, 0
      %p78 = por %p76, %p77
      %p79 = scmp.ne.s32.totalorder %s71, %s73
      %p80 = scmp.eq.s32.totalorder %s17, 3
      %p81 = por %p79, %p80
      %p82 = scmp.ne.s32.totalorder %s73, %s74
      %p83 = scmp.eq.s32.totalorder %s17, 0
      %p84 = por %p82, %p83
      %p85 = scmp.ne.s32.totalorder %s73, %s74
      %p86 = scmp.eq.s32.totalorder %s18, 3
      %p87 = por %p85, %p86
      %p89 = scmp.ne.s32.totalorder %s74, %s88
      %p90 = scmp.eq.s32.totalorder %s18, 0
      %p91 = por %p89, %p90
      %s92 = ssub.s32 %s19, %s38
      %s93 = ssub.s32 %s20, %s34
      %s94 = sor.u32 %s92, %s93
      %p95 = scmp.eq.s32.totalorder %s94, 0
      %s97 = sadd.s32 %s96, 1
      %s98 = scalar_select %p95, %s96, %s97
      %p101 = pneg %p95
      %p102 = scmp.eq.s32.totalorder %s12, 3
      %p103 = por %p101, %p102
      %p104 = scmp.ne.s32.totalorder %s96, %s99
      %p105 = scmp.eq.s32.totalorder %s12, 0
      %p106 = por %p104, %p105
      %p107 = scmp.ne.s32.totalorder %s96, %s99
      %p108 = scmp.eq.s32.totalorder %s17, 3
      %p109 = por %p107, %p108
      %p110 = scmp.ne.s32.totalorder %s99, %s100
      %p111 = scmp.eq.s32.totalorder %s17, 0
      %p112 = por %p110, %p111
      %p113 = scmp.ne.s32.totalorder %s99, %s100
      %p114 = scmp.eq.s32.totalorder %s18, 3
      %p115 = por %p113, %p114
      %p117 = scmp.ne.s32.totalorder %s100, %s116
      %p118 = scmp.eq.s32.totalorder %s18, 0
      %p119 = por %p117, %p118
      %p120 = scmp.le.s32.totalorder 1, %s12
      %p121 = scmp.lt.s32.totalorder %s12, 5
      %p122 = pnand %p120, %p121
      %p123 = pneg %p122
      // Predicated region
      $region9: #{tpu_custom_call.1} parent=5 // pred_check
        _
      $region10: #{tpu_custom_call.1} parent=5 // pred_check_branch
        %125 = sbr.rel (%p122) target = $region12
      $region11: #{tpu_custom_call.1} parent=5 // pred_region
        %s126 = ssub.s32 %s12, 1
        // Predicated region
        $region13: #{tpu_custom_call.1} parent=11 // pred_check
          %p127 = pneg %p84
        $region14: #{tpu_custom_call.1} parent=11 // pred_check_branch
          %129 = sbr.rel (%p127) target = $region16
        $region15: #{tpu_custom_call.1} parent=11 // pred_region
          %131 = vsyncadd [#allocation6], 0
          %s133 = sshll.u32 %s1, 4
          %s134 = int_to_ptr.hbm [resolvable:$true] %s133
          %s135 = sshll.u32 [#allocation5], 4
          %s136 = int_to_ptr.vmem [resolvable:$true] %s135
          %138 = dma.hbm_to_vmem [thread:$0]  %s134, 16, %s136, [#allocation6]
        $region16: #{tpu_custom_call.1} parent=11 // pred_fallthru
          _
      $region12: #{tpu_custom_call.1} parent=5 // pred_fallthru
        _
      %p139 = scmp.lt.s32.totalorder %s12, 4
      // Predicated region
      $region17: #{tpu_custom_call.1} parent=5 // pred_check
        %p140 = pneg %p139
      $region18: #{tpu_custom_call.1} parent=5 // pred_check_branch
        %142 = sbr.rel (%p140) target = $region20
      $region19: #{tpu_custom_call.1} parent=5 // pred_region
        // Predicated region
        $region21: #{tpu_custom_call.1} parent=19 // pred_check
          %p143 = pneg %p57
        $region22: #{tpu_custom_call.1} parent=19 // pred_check_branch
          %145 = sbr.rel (%p143) target = $region24
        $region23: #{tpu_custom_call.1} parent=19 // pred_region
          %s146 = sand.u32 %s47, 1
          %s147 = scalar_lea.sflag [#allocation4], %s146
          %s148 = sand.u32 %s47, 1
          %s149 = smul.addr %s148, 8
          %s150 = scalar_lea.vmem [#allocation3], %s149
          %s151 = smul.u32 %s20, 2
          %s152 = sadd.s32 %s151, %s21
          %154 = vsyncadd %s147, 0
          %s155 = smul.addr %s19, 2
          %s156 = sadd.s32 %s152, %s155
          %s157 = smul.addr %s156, 8
          %s158 = scalar_lea.hbm %s0, %s157
          %s160 = sshll.u32 %s158, 4
          %s161 = int_to_ptr.hbm [resolvable:$true] %s160
          %s162 = sshll.u32 %s150, 4
          %s163 = int_to_ptr.vmem [resolvable:$true] %s162
          %165 = dma.hbm_to_vmem [thread:$0]  %s161, 128, %s163, %s147
        $region24: #{tpu_custom_call.1} parent=19 // pred_fallthru
          _
      $region20: #{tpu_custom_call.1} parent=5 // pred_fallthru
        _
      %p166 = scmp.le.s32.totalorder 1, %s12
      %p167 = scmp.lt.s32.totalorder %s12, 5
      %p168 = pnand %p166, %p167
      %p169 = pneg %p168
      // Predicated region
      $region25: #{tpu_custom_call.1} parent=5 // pred_check
        _
      $region26: #{tpu_custom_call.1} parent=5 // pred_check_branch
        %171 = sbr.rel (%p168) target = $region28
      $region27: #{tpu_custom_call.1} parent=5 // pred_region
        %s172 = ssub.s32 %s12, 1
        %s173 = sand.u32 %s50, 1
        %s174 = scalar_lea.sflag [#allocation4], %s173
        %s175 = sand.u32 %s50, 1
        %s176 = smul.addr %s175, 8
        %s177 = scalar_lea.vmem [#allocation3], %s176
        // Predicated region
        $region29: #{tpu_custom_call.1} parent=27 // pred_check
          %p178 = pneg %p63
        $region30: #{tpu_custom_call.1} parent=27 // pred_check_branch
          %180 = sbr.rel (%p178) target = $region32
        $region31: #{tpu_custom_call.1} parent=27 // pred_region
          %182 = dma.done %s174, 128
        $region32: #{tpu_custom_call.1} parent=27 // pred_fallthru
          _
        // Predicated region
        $region33: #{tpu_custom_call.1} parent=27 // pred_check
          %p183 = pneg %p84
        $region34: #{tpu_custom_call.1} parent=27 // pred_check_branch
          %185 = sbr.rel (%p183) target = $region36
        $region35: #{tpu_custom_call.1} parent=27 // pred_region
          %187 = dma.done [#allocation6], 16
        $region36: #{tpu_custom_call.1} parent=27 // pred_fallthru
          _
        %s188 = sand.u32 %s50, 1
        %s189 = scalar_lea.sflag [#allocation4], %s188
        %s190 = sand.u32 %s50, 1
        %s191 = smul.addr %s190, 8
        %s192 = scalar_lea.vmem [#allocation3], %s191
        %p193 = pneg %p63
        %p194 = pneg %p60
        %p195 = pneg %p84
        %p196 = pneg %p81
        %p197 = pneg %p112
        %p198 = pneg %p109
        %p199 = scmp.lt.s32.totalorder %s22, 1
        %s200 = scalar_select %p199, %s22, 1
        %p201 = scmp.lt.s32.totalorder %s23, 0
        %s202 = scalar_select %p201, %s23, 0
        %s203 = sadd.s32 %s202, %s200
        %s204 = scalar_lea.vmem %s2, %s203
        %s205 = smul.u32 %s23, 2
        %s206 = sadd.s32 %s205, %s24
        %p207 = scmp.lt.s32.totalorder %s22, 1
        %s208 = scalar_select %p207, %s22, 1
        %p209 = scmp.lt.s32.totalorder %s23, 0
        %s210 = scalar_select %p209, %s23, 0
        %s211 = sadd.s32 %s210, %s208
        %s212 = scalar_lea.vmem %s2, %s211
        %p213 = scmp.eq.s32.totalorder %s24, 0
        // Predicated region
        $region37: #{tpu_custom_call.1} parent=27 // pred_check
          %p214 = pneg %p213
        $region38: #{tpu_custom_call.1} parent=27 // pred_check_branch
          %216 = sbr.rel (%p214) target = $region40
        $region39: #{tpu_custom_call.1} parent=27 // pred_region
          %vm217 = vcmask 253952
          %218 = vst.msk [vmem:[#allocation2] sm:$0x1] %vm217, 0.0
        $region40: #{tpu_custom_call.1} parent=27 // pred_fallthru
          _
        %v219 = vld [vmem:[#allocation2] sm:$0x1]
        %v220 = vld [vmem:[%s177] sm:$0xff]
        %vm221 = vcmask 261120
        %v222 = vsel %vm221, %v220, 0.0
        %v223 = vrot.slane %v222, 4
        %v224 = vadd.f32 %v222, %v223
        %v225 = vrot.slane %v224, 2
        %v226 = vadd.f32 %v224, %v225
        %v227 = vrot.slane %v226, 1
        %v228 = vadd.f32 %v226, %v227
        %v229 = vadd.f32 %v219, %v228
        %vm230 = vcmask 253952
        %231 = vst.msk [vmem:[#allocation2] sm:$0x1] %vm230, %v229
        %p232 = scmp.eq.s32.totalorder %s24, 1
        // Predicated region
        $region41: #{tpu_custom_call.1} parent=27 // pred_check
          %p233 = pneg %p232
        $region42: #{tpu_custom_call.1} parent=27 // pred_check_branch
          %235 = sbr.rel (%p233) target = $region44
        $region43: #{tpu_custom_call.1} parent=27 // pred_region
          %v236 = vld [vmem:[%s177 + $0x7] sm:$0x1]
          %p237 = scmp.eq.s32.totalorder %s23, 0
          %s238 = scalar_select %p237, 1, 0
          %s239 = scvt.s32.f32 %s238
          %v240 = vld [vmem:[#allocation2] sm:$0x1]
          %v241 = vstv %s239
          %v242 = vmul.f32 %v241, %v236
          %v243 = vsub.f32 %v240, %v242
          %v244 = vld [vmem:[#allocation5] sm:$0x1]
          %v245 = vmul.f32 %v243, %v244
          %v246 = vsel %vm230, %v245, 0.0
          %247 = vadd.xlane.f32.xlu0 %v246
          %v248 = vpop.xlane.xlu0 %247
          %vm249 = vcmask 0
          %250 = vst.msk [vmem:[%s212] sm:$0x1] %vm249, %v248
        $region44: #{tpu_custom_call.1} parent=27 // pred_fallthru
          _
        %p251 = scmp.lt.s32.totalorder %s22, 1
        %s252 = scalar_select %p251, %s22, 1
        %p253 = scmp.lt.s32.totalorder %s23, 0
        %s254 = scalar_select %p253, %s23, 0
        %s255 = sadd.s32 %s254, %s252
        %s256 = scalar_lea.vmem %s2, %s255
        // Predicated region
        $region45: #{tpu_custom_call.1} parent=27 // pred_check
          %p257 = pneg %p109
        $region46: #{tpu_custom_call.1} parent=27 // pred_check_branch
          %259 = sbr.rel (%p257) target = $region48
        $region47: #{tpu_custom_call.1} parent=27 // pred_region
          _
        $region48: #{tpu_custom_call.1} parent=27 // pred_fallthru
          _
      $region28: #{tpu_custom_call.1} parent=5 // pred_fallthru
        _
      %p260 = scmp.le.s32.totalorder 2, %s12
      // Predicated region
      $region49: #{tpu_custom_call.1} parent=5 // pred_check
        %p261 = pneg %p260
      $region50: #{tpu_custom_call.1} parent=5 // pred_check_branch
        %263 = sbr.rel (%p261) target = $region52
      $region51: #{tpu_custom_call.1} parent=5 // pred_region
        %s264 = ssub.s32 %s12, 2
        // Predicated region
        $region53: #{tpu_custom_call.1} parent=51 // pred_check
          %p265 = pneg %p115
        $region54: #{tpu_custom_call.1} parent=51 // pred_check_branch
          %267 = sbr.rel (%p265) target = $region56
        $region55: #{tpu_custom_call.1} parent=51 // pred_region
          %p268 = scmp.lt.s32.totalorder %s25, 1
          %s269 = scalar_select %p268, %s25, 1
          %p270 = scmp.lt.s32.totalorder %s26, 0
          %s271 = scalar_select %p270, %s26, 0
          %s272 = sadd.s32 %s271, %s269
          %s273 = scalar_lea.vmem %s2, %s272
        $region56: #{tpu_custom_call.1} parent=51 // pred_fallthru
          _
      $region52: #{tpu_custom_call.1} parent=5 // pred_fallthru
        _
    $region6: #{tpu_custom_call.1} parent=1 // loop_footer
      %s16 = sadd.s32 1, %s12
    $region7: #{tpu_custom_call.1} parent=1 // loop_footer_branch
      %11 = sbr.rel target = $region3
    $region8: #{tpu_custom_call.1} parent=1 // loop_exit
      _
    %274 = vsyncpa [#allocation4], 1
    %s275 = scalar_lea.sflag [#allocation4], 1
    %276 = vsyncpa %s275, 1
    %277 = vsyncpa [#allocation6], 1

</llo_original>
